<compile_context>
chip_gen: v7x
topology: tpu7x:2x2x1
jax: 0.10.0
libtpu: 0.0.40
codegen_flags: <defaults>
</compile_context>

<pallas_src>
import functools

import jax
import jax.numpy as jnp
from jax.experimental import pallas as pl
from jax.experimental.pallas import tpu as pltpu

_LANE = 128


def _min_sublane(dtype):
    # f32 -> 8, bf16 -> 16, int8/fp8 -> 32 (sub-32-bit dtypes pack on sublanes).
    return max(8, 8 * (4 // jnp.dtype(dtype).itemsize))


def _default_tile_rows():
    # HBM-bound kernel: bigger blocks amortize per-grid-step overhead.
    # 8192 rows (4 MiB f32 / input / buffer) on v7x (3.2 TB/s HBM, steps are
    # short), 4096 elsewhere (fits v5e's 16 MiB scoped-VMEM default once we
    # raise vmem_limit_bytes with headroom).
    try:
        kind = jax.devices()[0].device_kind.lower()
    except Exception:  # defensive: never fail just picking a tile size
        return 4096
    if "v7" in kind or "7x" in kind:
        return 8192
    return 4096


def _sse_partial_kernel(d_ref, x_ref, o_ref, *, total_rows, tile_rows, chunk,
                        need_mask):
    """Per-block partial sum of (d - x)^2, reduced to an (8, 128) vreg tile.

    Streams the block through an explicit (8, 128) f32 accumulator (chunked
    fori_loop) instead of materializing the full squared tile in VMEM.
    """
    i = pl.program_id(0)

    def block_sum(masked):
        def body(j, acc):
            r0 = pl.multiple_of(j * chunk, chunk)
            d = d_ref[pl.ds(r0, chunk), :].astype(jnp.float32)
            x = x_ref[pl.ds(r0, chunk), :].astype(jnp.float32)
            diff = d - x
            sq = diff * diff
            if masked:
                # Only the last grid block can over-read past the slab end.
                # The OOB rows hold garbage; jnp.where is a select, so even
                # NaN/Inf garbage cannot propagate into the sum.  Do not
                # remove this mask.
                row_ids = (i * tile_rows + r0
                           + jax.lax.broadcasted_iota(jnp.int32,
                                                      (chunk, _LANE), 0))
                sq = jnp.where(row_ids < total_rows, sq, 0.0)
            return acc + jnp.sum(sq.reshape(chunk // 8, 8, _LANE), axis=0)

        return jax.lax.fori_loop(0, tile_rows // chunk, body,
                                 jnp.zeros((8, _LANE), jnp.float32))

    if need_mask:
        last = pl.num_programs(0) - 1

        @pl.when(i < last)
        def _():
            o_ref[...] = block_sum(False)

        @pl.when(i == last)
        def _():
            o_ref[...] = block_sum(True)
    else:
        o_ref[...] = block_sum(False)


def _sum_squared_error(a, b, *, tile_rows=None):
    """sum((a - b)^2) over all elements via a Pallas TPU kernel."""
    assert a.shape == b.shape
    n_elem = int(a.size)
    sublane = max(_min_sublane(a.dtype), _min_sublane(b.dtype))

    a_flat = a.reshape(-1)
    b_flat = b.reshape(-1)

    if n_elem < sublane * _LANE:
        # Tiny input: not worth a kernel launch.
        d = a_flat.astype(jnp.float32) - b_flat.astype(jnp.float32)
        return jnp.sum(d * d)

    if tile_rows is None:
        tile_rows = _default_tile_rows()

    # Lane-dense main slab: first floor(n/128)*128 elements as (rows, 128).
    rows = n_elem // _LANE
    main = rows * _LANE

    tail_sse = jnp.float32(0.0)
    if main != n_elem:
        # <=127-element tail handled in plain JAX (no padded full-tensor copy).
        # TODO(synk): the prefix slice below may still materialize one copy of
        # the main slab in XLA on this rare odd-size path.
        da = a_flat[main:].astype(jnp.float32)
        db = b_flat[main:].astype(jnp.float32)
        tail_sse = jnp.sum((da - db) * (da - db))
        a_flat = jax.lax.slice(a_flat, (0,), (main,))
        b_flat = jax.lax.slice(b_flat, (0,), (main,))

    a2 = a_flat.reshape(rows, _LANE)
    b2 = b_flat.reshape(rows, _LANE)

    # Block rows: multiple of the (packed) sublane count, capped by the slab.
    tr = min(int(tile_rows), (rows // sublane) * sublane)
    tr = max(sublane, (tr // sublane) * sublane)
    n_blocks = pl.cdiv(rows, tr)
    need_mask = (rows % tr) != 0

    # Inner-loop chunk: largest of 64/32/16 rows dividing the block and
    # respecting sublane packing (keeps temporaries to a few vregs).
    chunk = sublane
    for c in (64, 32, 16):
        if c >= sublane and tr % c == 0:
            chunk = c
            break

    itemsize = jnp.dtype(a.dtype).itemsize + jnp.dtype(b.dtype).itemsize
    block_in_bytes = tr * _LANE * itemsize
    out_bytes = n_blocks * 8 * _LANE * 4
    # Double-buffered inputs + outputs + headroom; explicit so larger blocks
    # never trip a generation's scoped-VMEM default (v5e: 16 MiB).
    vmem_needed = 2 * block_in_bytes + 2 * 8 * _LANE * 4
    vmem_limit = int(min(max(vmem_needed + (8 << 20), 32 << 20), 48 << 20))

    partial = pl.pallas_call(
        functools.partial(_sse_partial_kernel, total_rows=rows, tile_rows=tr,
                          chunk=chunk, need_mask=need_mask),
        out_shape=jax.ShapeDtypeStruct((n_blocks * 8, _LANE), jnp.float32),
        grid=(n_blocks,),
        in_specs=[
            pl.BlockSpec((tr, _LANE), lambda i: (i, 0)),
            pl.BlockSpec((tr, _LANE), lambda i: (i, 0)),
        ],
        out_specs=pl.BlockSpec((8, _LANE), lambda i: (i, 0)),
        compiler_params=pltpu.CompilerParams(
            dimension_semantics=("parallel",),
            vmem_limit_bytes=vmem_limit),
        cost_estimate=pl.CostEstimate(
            flops=3 * rows * _LANE,
            transcendentals=0,
            bytes_accessed=rows * _LANE * itemsize + out_bytes),
    )(a2, b2)

    # Tiny second-stage tree reduction (a few KB per ~GB of input).
    return jnp.sum(partial) + tail_sse


def vae_loss(decoded, x, mu, log_var, *, beta, tile_rows=None):
    assert decoded.shape == x.shape
    batch_size = decoded.shape[0]

    # Pass decoded/x in their native dtype; the kernel upcasts to f32 inside.
    sse = _sum_squared_error(decoded, x, tile_rows=tile_rows)
    recon = sse / jnp.float32(batch_size)

    # KL term over the tiny (N, latent) tensors -> plain JAX.
    mu32 = mu.astype(jnp.float32)
    lv32 = log_var.astype(jnp.float32)
    kl = jnp.float32(-0.5) * jnp.mean(1.0 + lv32 - mu32 * mu32 - jnp.exp(lv32))

    total = recon + jnp.float32(beta) * kl
    return total, recon, kl


def vae_loss_ref(decoded, x, mu, log_var, beta):
    recon = jnp.sum((decoded - x) ** 2) / decoded.shape[0]
    kl = -0.5 * jnp.mean(1.0 + log_var - mu ** 2 - jnp.exp(log_var))
    return recon + beta * kl, recon, kl


if __name__ == "__main__":
    key = jax.random.PRNGKey(0)
    k1, k2, k3, k4 = jax.random.split(key, 4)

    # Small shapes consistent with a 3D VAE: decoded/x NCDHW, mu/log_var (N, latent).
    B, C, D, H, W = 2, 4, 8, 16, 16
    latent = 32
    beta = 0.5

    decoded = jax.random.normal(k1, (B, C, D, H, W), dtype=jnp.float32)
    x = jax.random.normal(k2, (B, C, D, H, W), dtype=jnp.float32)
    mu = 0.5 * jax.random.normal(k3, (B, latent), dtype=jnp.float32)
    log_var = 0.1 * jax.random.normal(k4, (B, latent), dtype=jnp.float32)

    total, recon, kl = vae_loss(decoded, x, mu, log_var, beta=beta)
    jax.block_until_ready((total, recon, kl))

    t_ref, r_ref, k_ref = vae_loss_ref(decoded, x, mu, log_var, beta)
    assert jnp.allclose(total, t_ref, rtol=1e-5, atol=1e-5), (total, t_ref)
    assert jnp.allclose(recon, r_ref, rtol=1e-5, atol=1e-5), (recon, r_ref)
    assert jnp.allclose(kl, k_ref, rtol=1e-5, atol=1e-5), (kl, k_ref)

    # Non-multiple-of-128 element count: exercises the masked (pl.when) last
    # block and the JAX tail path (no padded full-tensor copy anymore).
    k5, k6 = jax.random.split(k1)
    d_odd = jax.random.normal(k5, (2, 3, 5, 7, 11), dtype=jnp.float32)
    x_odd = jax.random.normal(k6, (2, 3, 5, 7, 11), dtype=jnp.float32)
    t2, r2, kl2 = vae_loss(d_odd, x_odd, mu, log_var, beta=beta)
    jax.block_until_ready((t2, r2, kl2))
    t2_ref, r2_ref, _ = vae_loss_ref(d_odd, x_odd, mu, log_var, beta)
    assert jnp.allclose(t2, t2_ref, rtol=1e-5, atol=1e-5), (t2, t2_ref)
    assert jnp.allclose(r2, r2_ref, rtol=1e-5, atol=1e-5), (r2, r2_ref)

    print("KERNEL_OK")
</pallas_src>

<mosaic_0001>
module attributes {stable_mosaic.version = 11 : i64} {
  func.func @_sse_partial_kernel(%arg0: i32, %arg1: memref<128x128xf32, #tpu.memory_space<vmem>>, %arg2: memref<128x128xf32, #tpu.memory_space<vmem>>, %arg3: memref<8x128xf32, #tpu.memory_space<vmem>>) attributes {dimension_semantics = [#tpu.dimension_semantics<parallel>], iteration_bounds = array<i64: 1>, scalar_prefetch = 0 : i64, scratch_operands = 0 : i64, tpu.core_type = #tpu.core_type<tc>, window_params = [{transform_indices = @transform_0, window_bounds = array<i64: 128, 128>}, {transform_indices = @transform_1, window_bounds = array<i64: 128, 128>}, {transform_indices = @transform_2, window_bounds = array<i64: 8, 128>}]} {
    %cst = arith.constant 0.000000e+00 : f32
    %0 = vector.broadcast %cst : f32 to vector<8x128xf32>
    %c0_i32 = arith.constant 0 : i32
    %c2_i32 = arith.constant 2 : i32
    %1 = arith.addi %c0_i32, %c2_i32 : i32
    %c1_i32 = arith.constant 1 : i32
    %2 = scf.for %arg4 = %c0_i32 to %1 step %c1_i32 iter_args(%arg5 = %0) -> (vector<8x128xf32>)  : i32 {
      %c64_i32 = arith.constant 64 : i32
      %4 = arith.muli %arg4, %c64_i32 : i32
      %5 = tpu.assume_multiple %4, 64 : i32
      %6 = arith.index_cast %5 : i32 to index
      %c0_2 = arith.constant 0 : index
      %7 = vector.load %arg1[%6, %c0_2] : memref<128x128xf32, #tpu.memory_space<vmem>>, vector<64x128xf32>
      %8 = arith.index_cast %5 : i32 to index
      %c0_3 = arith.constant 0 : index
      %9 = vector.load %arg2[%8, %c0_3] : memref<128x128xf32, #tpu.memory_space<vmem>>, vector<64x128xf32>
      %10 = arith.subf %7, %9 : vector<64x128xf32>
      %11 = arith.mulf %10, %10 : vector<64x128xf32>
      %12 = vector.shape_cast %11 : vector<64x128xf32> to vector<8x8x128xf32>
      %cst_4 = arith.constant dense<0.000000e+00> : vector<8x128xf32>
      %13 = vector.multi_reduction <add>, %12, %cst_4 [0] : vector<8x8x128xf32> to vector<8x128xf32>
      %14 = arith.addf %arg5, %13 : vector<8x128xf32>
      scf.yield %14 : vector<8x128xf32>
    }
    %c2_i32_0 = arith.constant 2 : i32
    %c0 = arith.constant 0 : index
    %c0_1 = arith.constant 0 : index
    %3 = vector.load %arg3[%c0, %c0_1] : memref<8x128xf32, #tpu.memory_space<vmem>>, vector<8x128xf32>
    tpu.vector_store %arg3[%c0, %c0_1], %2 {strides = array<i32>} : memref<8x128xf32, #tpu.memory_space<vmem>>, vector<8x128xf32>,
    return
  }
  func.func @transform_0(%arg0: i32) -> (i32, i32) {
    %c0_i32 = arith.constant 0 : i32
    %c0_i32_0 = arith.constant 0 : i32
    return %arg0, %c0_i32 : i32, i32
  }
  func.func @transform_1(%arg0: i32) -> (i32, i32) {
    %c0_i32 = arith.constant 0 : i32
    %c0_i32_0 = arith.constant 0 : i32
    return %arg0, %c0_i32 : i32, i32
  }
  func.func @transform_2(%arg0: i32) -> (i32, i32) {
    %c0_i32 = arith.constant 0 : i32
    %c0_i32_0 = arith.constant 0 : i32
    return %arg0, %c0_i32 : i32, i32
  }
}

</mosaic_0001>

<llo_original>
// kernel: tpu_custom_call.1
$region0: #{tpu_custom_call.1}
  #allocation0 [shape = 'u32[]', space=smem, size = 0x4, offset = 0x4, fixed_abs, tag = 'smem constant byte address 0x4 - core index']
  #allocation1 [shape = 'u32[144,128]{1,0:T(1,128)}', space=vmem, size = 0x12000, scoped, tag = 'internal scratch']
  %s0 = inlined_call_operand.hbm [shape: f32[128,128], index: 0, kind: input, shape index: {}]
  %s1 = inlined_call_operand.hbm [shape: f32[128,128], index: 1, kind: input, shape index: {}]
  %s2 = inlined_call_operand.hbm [shape: f32[8,128], index: 2, kind: output, shape index: {}]
  %s3 = sld [smem:[#allocation0]]
  $region33: #{tpu_custom_call.1} parent=0
    _
  %s5 = ssub.s32 1, %s3
  %s6 = scalar_select 0, %s5, %s3
  $region1: #{tpu_custom_call.1} parent=0
    #allocation2 [shape = 'u8[65536]{0}', space=vmem, size = 0x10000, scoped, tag = 'input window, operand 0, single buffered']
    #allocation3 [shape = 's32[1]{0}', space=sflag, size = 0x4, scoped, tag = 'scoped memory for tpu_custom_call.1']
    #allocation4 [shape = 's32[1]{0}', space=sflag, size = 0x4, scoped, tag = 'scoped memory for tpu_custom_call.1']
    #allocation5 [shape = 'u8[65536]{0}', space=vmem, size = 0x10000, scoped, tag = 'input window, operand 1, single buffered']
    #allocation6 [shape = 's32[1]{0}', space=sflag, size = 0x4, scoped, tag = 'scoped memory for tpu_custom_call.1']
    #allocation7 [shape = 'u8[4096]{0}', space=vmem, size = 0x1000, scoped, tag = 'output window, operand 0, single buffered']
    %7 = vsyncpa [#allocation3], 0
    %8 = vsyncpa [#allocation6], 0
    %9 = vsyncpa [#allocation4], 0
    // Predicated region
    $region2: #{tpu_custom_call.1} parent=1 // pred_check
      _
    $region3: #{tpu_custom_call.1} parent=1 // pred_check_branch
      %11 = sbr.rel (0) target = $region5
    $region4: #{tpu_custom_call.1} parent=1 // pred_region
      %s13 = ssub.s32 2048, 2048
      %14 = vsyncadd [#allocation3], %s13
      %s15 = sshll.u32 [#allocation2], 4
      %s16 = int_to_ptr.vmem [resolvable:$true] %s15
      %21 = dma.hbm_to_vmem [thread:$0]  %s0, 2048, %s16, [#allocation3], 128, 128, 8
    $region5: #{tpu_custom_call.1} parent=1 // pred_fallthru
      _
    // Predicated region
    $region6: #{tpu_custom_call.1} parent=1 // pred_check
      _
    $region7: #{tpu_custom_call.1} parent=1 // pred_check_branch
      %23 = sbr.rel (0) target = $region9
    $region8: #{tpu_custom_call.1} parent=1 // pred_region
      %s25 = ssub.s32 2048, 2048
      %26 = vsyncadd [#allocation6], %s25
      %s27 = sshll.u32 [#allocation5], 4
      %s28 = int_to_ptr.vmem [resolvable:$true] %s27
      %33 = dma.hbm_to_vmem [thread:$0]  %s1, 2048, %s28, [#allocation6], 128, 128, 8
    $region9: #{tpu_custom_call.1} parent=1 // pred_fallthru
      _
    // Predicated region
    $region10: #{tpu_custom_call.1} parent=1 // pred_check
      _
    $region11: #{tpu_custom_call.1} parent=1 // pred_check_branch
      %35 = sbr.rel (0) target = $region13
    $region12: #{tpu_custom_call.1} parent=1 // pred_region
      %36 = dma.done [#allocation3], 2048
    $region13: #{tpu_custom_call.1} parent=1 // pred_fallthru
      _
    // Predicated region
    $region14: #{tpu_custom_call.1} parent=1 // pred_check
      _
    $region15: #{tpu_custom_call.1} parent=1 // pred_check_branch
      %38 = sbr.rel (0) target = $region17
    $region16: #{tpu_custom_call.1} parent=1 // pred_region
      %39 = dma.done [#allocation6], 2048
    $region17: #{tpu_custom_call.1} parent=1 // pred_fallthru
      _
    loop: start=0, step=1, limit=2
    $region18: #{tpu_custom_call.1} parent=1 // loop_pre_header
      _
    $region19: #{tpu_custom_call.1} parent=1 // loop_header
      %s41 = sphi 0, %s45
      %p42 = scmp.ge.s32.totalorder %s41, 2
      %v46 = vphi 0.0, %v89
    $region20: #{tpu_custom_call.1} parent=1 // loop_header_branch
      %44 = sbr.rel (%p42) target = $region24
    $region21: #{tpu_custom_call.1} parent=1 // loop_body
      %s47 = smul.u32 %s41, 64
      %s48 = scalar_lea.vmem [#allocation2], %s47
      %v49 = vld [vmem:[%s48] sm:$0xff]
      %v50 = vld [vmem:[%s48 + $0x8] sm:$0xff]
      %v51 = vld [vmem:[%s48 + $0x10] sm:$0xff]
      %v52 = vld [vmem:[%s48 + $0x18] sm:$0xff]
      %v53 = vld [vmem:[%s48 + $0x20] sm:$0xff]
      %v54 = vld [vmem:[%s48 + $0x28] sm:$0xff]
      %v55 = vld [vmem:[%s48 + $0x30] sm:$0xff]
      %v56 = vld [vmem:[%s48 + $0x38] sm:$0xff]
      %s57 = scalar_lea.vmem [#allocation5], %s47
      %v58 = vld [vmem:[%s57] sm:$0xff]
      %v59 = vld [vmem:[%s57 + $0x8] sm:$0xff]
      %v60 = vld [vmem:[%s57 + $0x10] sm:$0xff]
      %v61 = vld [vmem:[%s57 + $0x18] sm:$0xff]
      %v62 = vld [vmem:[%s57 + $0x20] sm:$0xff]
      %v63 = vld [vmem:[%s57 + $0x28] sm:$0xff]
      %v64 = vld [vmem:[%s57 + $0x30] sm:$0xff]
      %v65 = vld [vmem:[%s57 + $0x38] sm:$0xff]
      %v66 = vsub.f32 %v49, %v58
      %v67 = vsub.f32 %v50, %v59
      %v68 = vsub.f32 %v51, %v60
      %v69 = vsub.f32 %v52, %v61
      %v70 = vsub.f32 %v53, %v62
      %v71 = vsub.f32 %v54, %v63
      %v72 = vsub.f32 %v55, %v64
      %v73 = vsub.f32 %v56, %v65
      %v74 = vmul.f32 %v66, %v66
      %v75 = vmul.f32 %v67, %v67
      %v76 = vmul.f32 %v68, %v68
      %v77 = vmul.f32 %v69, %v69
      %v78 = vmul.f32 %v70, %v70
      %v79 = vmul.f32 %v71, %v71
      %v80 = vmul.f32 %v72, %v72
      %v81 = vmul.f32 %v73, %v73
      %v82 = vadd.f32 %v74, %v75
      %v83 = vadd.f32 %v82, %v76
      %v84 = vadd.f32 %v83, %v77
      %v85 = vadd.f32 %v84, %v78
      %v86 = vadd.f32 %v85, %v79
      %v87 = vadd.f32 %v86, %v80
      %v88 = vadd.f32 %v87, %v81
      %v89 = vadd.f32 %v46, %v88
    $region22: #{tpu_custom_call.1} parent=1 // loop_footer
      %s45 = sadd.s32 1, %s41
    $region23: #{tpu_custom_call.1} parent=1 // loop_footer_branch
      %40 = sbr.rel target = $region19
    $region24: #{tpu_custom_call.1} parent=1 // loop_exit
      _
    %90 = vst [vmem:[#allocation7] sm:$0xff] %v46
    // Predicated region
    $region25: #{tpu_custom_call.1} parent=1 // pred_check
      _
    $region26: #{tpu_custom_call.1} parent=1 // pred_check_branch
      %92 = sbr.rel (0) target = $region28
    $region27: #{tpu_custom_call.1} parent=1 // pred_region
      %s94 = ssub.s32 128, 128
      %95 = vsyncadd [#allocation4], %s94
      %s97 = sshll.u32 [#allocation7], 4
      %s98 = int_to_ptr.vmem [resolvable:$true] %s97
      %100 = dma.vmem_to_hbm [thread:$0]  %s98, 128, %s2, [#allocation4]
    $region28: #{tpu_custom_call.1} parent=1 // pred_fallthru
      _
    // Predicated region
    $region29: #{tpu_custom_call.1} parent=1 // pred_check
      _
    $region30: #{tpu_custom_call.1} parent=1 // pred_check_branch
      %102 = sbr.rel (0) target = $region32
    $region31: #{tpu_custom_call.1} parent=1 // pred_region
      %103 = dma.done [#allocation4], 128
    $region32: #{tpu_custom_call.1} parent=1 // pred_fallthru
      _
    %104 = vsyncpa [#allocation3], 1
    %105 = vsyncpa [#allocation6], 1
    %106 = vsyncpa [#allocation4], 1

</llo_original>
